<compile_context>
chip_gen: v5e
topology: v5e:2x2
jax: 0.10.0
libtpu: 0.0.40
codegen_flags: <defaults>
</compile_context>

<pallas_src>
import numpy as np
import jax
import jax.numpy as jnp
from jax.experimental import pallas as pl
from jax.experimental.pallas import tpu as pltpu

EPS = 1e-5
KH = KW = 3
STRIDE = 2
C1 = 16
C2 = 32


def _bn_relu(y, gamma, beta, n_rows):
    # nn.BatchNorm2d training-mode forward (biased variance, eps=1e-5), algebraically folded
    # into a single per-channel scale/shift so the (M, N) tile only sees one mul + one add.
    inv_n = 1.0 / float(n_rows)
    mean = jnp.sum(y, axis=0, keepdims=True) * inv_n
    d = y - mean
    var = jnp.sum(d * d, axis=0, keepdims=True) * inv_n
    scale = gamma * jax.lax.rsqrt(var + EPS)          # rsqrt -> EUP (free slot)
    shift = beta - mean * scale
    return jnp.maximum(y * scale + shift, 0.0)


def fused_cnn_kernel(cols1_ref, w1_ref, g1_ref, b1_ref,
                     sel_ref, w2_ref, g2_ref, b2_ref, o_ref):
    # cols1: (M1, 9)       bf16  im2col of the Cin=1 input (built in the wrapper)
    # w1:    (9, 16)       bf16
    # sel:   (9, M2, M1)   bf16  0/1 per-tap row selection == in-VMEM im2col of layer 2
    # w2:    (9, 16, 32)   bf16  per-tap weight slabs
    # g*/b*: (1, C)        f32   BatchNorm affine params
    # o:     (B, Ho2*Wo2, 32) f32
    M1 = cols1_ref.shape[0]
    n_taps, M2, _ = sel_ref.shape
    B = o_ref.shape[0]
    per_b = M2 // B

    # ---- layer 1: conv GEMM (bias cancelled by train-mode BN) + BN + ReLU ----
    y1 = jnp.dot(cols1_ref[...], w1_ref[...], preferred_element_type=jnp.float32)
    h1 = _bn_relu(y1, g1_ref[...], b1_ref[...], M1).astype(jnp.bfloat16)      # (M1, 16)

    # ---- layer 2: im2col via selection matmuls + conv GEMM, accumulated over taps ----
    sel = sel_ref[...]
    w2 = w2_ref[...]
    y2 = jnp.zeros((M2, w2_ref.shape[2]), jnp.float32)
    for t in range(n_taps):                                                   # static unroll
        rows_t = jnp.dot(sel[t], h1, preferred_element_type=jnp.float32)      # (M2, 16)
        y2 = y2 + jnp.dot(rows_t.astype(jnp.bfloat16), w2[t],
                          preferred_element_type=jnp.float32)                 # (M2, 32)
    out2 = _bn_relu(y2, g2_ref[...], b2_ref[...], M2)                         # (M2, 32)

    # ---- write (B, Ho2*Wo2, 32) directly == Rearrange('b c h w -> b (h w) c') ----
    for b in range(B):
        o_ref[b, :, :] = out2[b * per_b:(b + 1) * per_b, :].astype(o_ref.dtype)


def _im2col_input(x_nchw):
    # Cin == 1: squeeze the channel (no NCHW->NHWC transpose needed), then im2col the tiny
    # raw input on the XLA side (the input has to come from HBM anyway).
    B, C, H, W = x_nchw.shape
    assert C == 1
    x = x_nchw[:, 0]
    Ho = (H - KH) // STRIDE + 1
    Wo = (W - KW) // STRIDE + 1
    taps = []
    for kh in range(KH):
        for kw in range(KW):
            taps.append(x[:, kh:kh + STRIDE * Ho:STRIDE, kw:kw + STRIDE * Wo:STRIDE])
    cols = jnp.stack(taps, axis=-1).reshape(B * Ho * Wo, KH * KW)
    return cols, (B, Ho, Wo)


def _make_selection(B, Ho1, Wo1):
    # Static 0/1 matrices S[t]: S[t] @ h1_flat gathers, for conv-2 tap t=(kh*3+kw), the
    # layer-1 rows needed by every layer-2 output position. Built once from shapes only.
    Ho2 = (Ho1 - KH) // STRIDE + 1
    Wo2 = (Wo1 - KW) // STRIDE + 1
    M1 = B * Ho1 * Wo1
    M2 = B * Ho2 * Wo2
    sel = np.zeros((KH * KW, M2, M1), np.float32)
    for b in range(B):
        for ho in range(Ho2):
            for wo in range(Wo2):
                m2 = (b * Ho2 + ho) * Wo2 + wo
                for kh in range(KH):
                    for kw in range(KW):
                        m1 = (b * Ho1 + STRIDE * ho + kh) * Wo1 + (STRIDE * wo + kw)
                        sel[kh * KW + kw, m2, m1] = 1.0
    return jnp.asarray(sel, jnp.bfloat16), (Ho2, Wo2)


def make_params(key):
    ks = jax.random.split(key, 8)
    # Conv2d(1, 16, 3, stride=2): weight stored as HWIO (3,3,1,16)
    w1 = 0.1 * jax.random.normal(ks[0], (3, 3, 1, 16), jnp.float32)
    b1 = 0.1 * jax.random.normal(ks[1], (16,), jnp.float32)   # unused: cancelled by train-mode BN
    g1 = 1.0 + 0.1 * jax.random.normal(ks[2], (16,), jnp.float32)
    be1 = 0.1 * jax.random.normal(ks[3], (16,), jnp.float32)
    # Conv2d(16, 32, 3, stride=2): weight stored as HWIO (3,3,16,32)
    w2 = 0.1 * jax.random.normal(ks[4], (3, 3, 16, 32), jnp.float32)
    b2 = 0.1 * jax.random.normal(ks[5], (32,), jnp.float32)   # unused: cancelled by train-mode BN
    g2 = 1.0 + 0.1 * jax.random.normal(ks[6], (32,), jnp.float32)
    be2 = 0.1 * jax.random.normal(ks[7], (32,), jnp.float32)
    return dict(w1=w1, b1=b1, g1=g1, be1=be1, w2=w2, b2=b2, g2=g2, be2=be2)


def cnn_forward_fn(x_nchw, params):
    cols1, (B, Ho1, Wo1) = _im2col_input(x_nchw)
    sel, (Ho2, Wo2) = _make_selection(B, Ho1, Wo1)
    M1 = B * Ho1 * Wo1
    M2 = B * Ho2 * Wo2

    cols1 = cols1.astype(jnp.bfloat16)
    w1 = params["w1"].reshape(KH * KW, C1).astype(jnp.bfloat16)       # HWIO -> (9, 16)
    w2 = params["w2"].reshape(KH * KW, C1, C2).astype(jnp.bfloat16)   # HWIO -> (9, 16, 32)
    g1 = params["g1"].reshape(1, C1)
    be1 = params["be1"].reshape(1, C1)
    g2 = params["g2"].reshape(1, C2)
    be2 = params["be2"].reshape(1, C2)
    # NOTE: params["b1"] / params["b2"] (conv biases) are intentionally not passed to the
    # kernel — a per-channel constant added before training-mode BatchNorm is a no-op.

    out = pl.pallas_call(
        fused_cnn_kernel,
        out_shape=jax.ShapeDtypeStruct((B, Ho2 * Wo2, C2), jnp.float32),
        grid=(1,),
        in_specs=[
            pl.BlockSpec((M1, KH * KW), lambda i: (0, 0)),
            pl.BlockSpec((KH * KW, C1), lambda i: (0, 0)),
            pl.BlockSpec((1, C1), lambda i: (0, 0)),
            pl.BlockSpec((1, C1), lambda i: (0, 0)),
            pl.BlockSpec((KH * KW, M2, M1), lambda i: (0, 0, 0)),
            pl.BlockSpec((KH * KW, C1, C2), lambda i: (0, 0, 0)),
            pl.BlockSpec((1, C2), lambda i: (0, 0)),
            pl.BlockSpec((1, C2), lambda i: (0, 0)),
        ],
        out_specs=pl.BlockSpec((B, Ho2 * Wo2, C2), lambda i: (0, 0, 0)),
        compiler_params=pltpu.CompilerParams(dimension_semantics=("arbitrary",)),
    )(cols1, w1, g1, be1, sel, w2, g2, be2)
    return out


cnn_forward = jax.jit(cnn_forward_fn)


if __name__ == "__main__":
    key = jax.random.PRNGKey(0)
    kx, kp = jax.random.split(key)
    # Input consistent with the module: batch=2, 1 channel, 16x16 spatial
    x = jax.random.normal(kx, (2, 1, 16, 16), jnp.float32)
    params = make_params(kp)

    out = cnn_forward(x, params)
    jax.block_until_ready(out)

    # 16x16 -> conv s2 -> 7x7 -> conv s2 -> 3x3 ; output (2, 9, 32)
    assert out.shape == (2, 9, 32), out.shape
    assert bool(jnp.all(jnp.isfinite(out)))
    print("KERNEL_OK")
</pallas_src>

<mosaic_0001>
module attributes {stable_mosaic.version = 11 : i64} {
  func.func @fused_cnn_kernel(%arg0: i32, %arg1: memref<98x9xbf16, #tpu.memory_space<vmem>>, %arg2: memref<9x16xbf16, #tpu.memory_space<vmem>>, %arg3: memref<1x16xf32, #tpu.memory_space<vmem>>, %arg4: memref<1x16xf32, #tpu.memory_space<vmem>>, %arg5: memref<9x18x98xbf16, #tpu.memory_space<vmem>>, %arg6: memref<9x16x32xbf16, #tpu.memory_space<vmem>>, %arg7: memref<1x32xf32, #tpu.memory_space<vmem>>, %arg8: memref<1x32xf32, #tpu.memory_space<vmem>>, %arg9: memref<2x9x32xf32, #tpu.memory_space<vmem>>) attributes {dimension_semantics = [#tpu.dimension_semantics<arbitrary>], iteration_bounds = array<i64: 1>, scalar_prefetch = 0 : i64, scratch_operands = 0 : i64, tpu.core_type = #tpu.core_type<tc>, window_params = [{pipeline_mode = #tpu.pipeline_mode<synchronous>, transform_indices = @transform_0, window_bounds = array<i64: 98, 9>}, {pipeline_mode = #tpu.pipeline_mode<synchronous>, transform_indices = @transform_1, window_bounds = array<i64: 9, 16>}, {pipeline_mode = #tpu.pipeline_mode<synchronous>, transform_indices = @transform_2, window_bounds = array<i64: 1, 16>}, {pipeline_mode = #tpu.pipeline_mode<synchronous>, transform_indices = @transform_3, window_bounds = array<i64: 1, 16>}, {pipeline_mode = #tpu.pipeline_mode<synchronous>, transform_indices = @transform_4, window_bounds = array<i64: 9, 18, 98>}, {pipeline_mode = #tpu.pipeline_mode<synchronous>, transform_indices = @transform_5, window_bounds = array<i64: 9, 16, 32>}, {pipeline_mode = #tpu.pipeline_mode<synchronous>, transform_indices = @transform_6, window_bounds = array<i64: 1, 32>}, {pipeline_mode = #tpu.pipeline_mode<synchronous>, transform_indices = @transform_7, window_bounds = array<i64: 1, 32>}, {pipeline_mode = #tpu.pipeline_mode<synchronous>, transform_indices = @transform_8, window_bounds = array<i64: 2, 9, 32>}]} {
    %c0 = arith.constant 0 : index
    %c0_0 = arith.constant 0 : index
    %0 = vector.load %arg1[%c0, %c0_0] : memref<98x9xbf16, #tpu.memory_space<vmem>>, vector<98x9xbf16>
    %c0_1 = arith.constant 0 : index
    %c0_2 = arith.constant 0 : index
    %1 = vector.load %arg2[%c0_1, %c0_2] : memref<9x16xbf16, #tpu.memory_space<vmem>>, vector<9x16xbf16>
    %cst = arith.constant dense<0.000000e+00> : vector<98x16xf32>
    %2 = tpu.matmul %0, %1, %cst {dimension_numbers = #tpu.dot_dimension_numbers<[1], [0], [0], [1], [0, 0, 1, 1], [], []>} : vector<98x9xbf16>, vector<9x16xbf16>, vector<98x16xf32> -> vector<98x16xf32>
    %c0_3 = arith.constant 0 : index
    %c0_4 = arith.constant 0 : index
    %3 = vector.load %arg3[%c0_3, %c0_4] : memref<1x16xf32, #tpu.memory_space<vmem>>, vector<1x16xf32>
    %c0_5 = arith.constant 0 : index
    %c0_6 = arith.constant 0 : index
    %4 = vector.load %arg4[%c0_5, %c0_6] : memref<1x16xf32, #tpu.memory_space<vmem>>, vector<1x16xf32>
    %cst_7 = arith.constant dense<0.000000e+00> : vector<16xf32>
    %5 = vector.multi_reduction <add>, %2, %cst_7 [0] : vector<98x16xf32> to vector<16xf32>
    %6 = vector.shape_cast %5 : vector<16xf32> to vector<1x16xf32>
    %cst_8 = arith.constant 0.0102040814 : f32
    %7 = vector.broadcast %cst_8 : f32 to vector<1x16xf32>
    %8 = arith.mulf %6, %7 : vector<1x16xf32>
    %9 = vector.broadcast %8 : vector<1x16xf32> to vector<98x16xf32>
    %10 = arith.subf %2, %9 : vector<98x16xf32>
    %11 = arith.mulf %10, %10 : vector<98x16xf32>
    %cst_9 = arith.constant dense<0.000000e+00> : vector<16xf32>
    %12 = vector.multi_reduction <add>, %11, %cst_9 [0] : vector<98x16xf32> to vector<16xf32>
    %13 = vector.shape_cast %12 : vector<16xf32> to vector<1x16xf32>
    %cst_10 = arith.constant 0.0102040814 : f32
    %14 = vector.broadcast %cst_10 : f32 to vector<1x16xf32>
    %15 = arith.mulf %13, %14 : vector<1x16xf32>
    %cst_11 = arith.constant 9.99999974E-6 : f32
    %16 = vector.broadcast %cst_11 : f32 to vector<1x16xf32>
    %17 = arith.addf %15, %16 : vector<1x16xf32>
    %18 = math.rsqrt %17 : vector<1x16xf32>
    %19 = arith.mulf %3, %18 : vector<1x16xf32>
    %20 = arith.mulf %8, %19 : vector<1x16xf32>
    %21 = arith.subf %4, %20 : vector<1x16xf32>
    %22 = vector.broadcast %19 : vector<1x16xf32> to vector<98x16xf32>
    %23 = arith.mulf %2, %22 : vector<98x16xf32>
    %24 = vector.broadcast %21 : vector<1x16xf32> to vector<98x16xf32>
    %25 = arith.addf %23, %24 : vector<98x16xf32>
    %cst_12 = arith.constant 0.000000e+00 : f32
    %26 = vector.broadcast %cst_12 : f32 to vector<98x16xf32>
    %27 = arith.maximumf %25, %26 : vector<98x16xf32>
    %28 = arith.truncf %27 : vector<98x16xf32> to vector<98x16xbf16>
    %c0_13 = arith.constant 0 : index
    %c0_14 = arith.constant 0 : index
    %c0_15 = arith.constant 0 : index
    %29 = vector.load %arg5[%c0_13, %c0_14, %c0_15] : memref<9x18x98xbf16, #tpu.memory_space<vmem>>, vector<9x18x98xbf16>
    %c0_16 = arith.constant 0 : index
    %c0_17 = arith.constant 0 : index
    %c0_18 = arith.constant 0 : index
    %30 = vector.load %arg6[%c0_16, %c0_17, %c0_18] : memref<9x16x32xbf16, #tpu.memory_space<vmem>>, vector<9x16x32xbf16>
    %cst_19 = arith.constant 0.000000e+00 : f32
    %31 = vector.broadcast %cst_19 : f32 to vector<18x32xf32>
    %32 = vector.extract_strided_slice %29 {offsets = [0, 0, 0], sizes = [1, 18, 98], strides = [1, 1, 1]} : vector<9x18x98xbf16> to vector<1x18x98xbf16>
    %33 = vector.shape_cast %32 : vector<1x18x98xbf16> to vector<18x98xbf16>
    %cst_20 = arith.constant dense<0.000000e+00> : vector<18x16xf32>
    %34 = tpu.matmul %33, %28, %cst_20 {dimension_numbers = #tpu.dot_dimension_numbers<[1], [0], [0], [1], [0, 0, 1, 1], [], []>} : vector<18x98xbf16>, vector<98x16xbf16>, vector<18x16xf32> -> vector<18x16xf32>
    %35 = arith.truncf %34 : vector<18x16xf32> to vector<18x16xbf16>
    %36 = vector.extract_strided_slice %30 {offsets = [0, 0, 0], sizes = [1, 16, 32], strides = [1, 1, 1]} : vector<9x16x32xbf16> to vector<1x16x32xbf16>
    %37 = vector.shape_cast %36 : vector<1x16x32xbf16> to vector<16x32xbf16>
    %cst_21 = arith.constant dense<0.000000e+00> : vector<18x32xf32>
    %38 = tpu.matmul %35, %37, %cst_21 {dimension_numbers = #tpu.dot_dimension_numbers<[1], [0], [0], [1], [0, 0, 1, 1], [], []>} : vector<18x16xbf16>, vector<16x32xbf16>, vector<18x32xf32> -> vector<18x32xf32>
    %39 = arith.addf %31, %38 : vector<18x32xf32>
    %40 = vector.extract_strided_slice %29 {offsets = [1, 0, 0], sizes = [1, 18, 98], strides = [1, 1, 1]} : vector<9x18x98xbf16> to vector<1x18x98xbf16>
    %41 = vector.shape_cast %40 : vector<1x18x98xbf16> to vector<18x98xbf16>
    %cst_22 = arith.constant dense<0.000000e+00> : vector<18x16xf32>
    %42 = tpu.matmul %41, %28, %cst_22 {dimension_numbers = #tpu.dot_dimension_numbers<[1], [0], [0], [1], [0, 0, 1, 1], [], []>} : vector<18x98xbf16>, vector<98x16xbf16>, vector<18x16xf32> -> vector<18x16xf32>
    %43 = arith.truncf %42 : vector<18x16xf32> to vector<18x16xbf16>
    %44 = vector.extract_strided_slice %30 {offsets = [1, 0, 0], sizes = [1, 16, 32], strides = [1, 1, 1]} : vector<9x16x32xbf16> to vector<1x16x32xbf16>
    %45 = vector.shape_cast %44 : vector<1x16x32xbf16> to vector<16x32xbf16>
    %cst_23 = arith.constant dense<0.000000e+00> : vector<18x32xf32>
    %46 = tpu.matmul %43, %45, %cst_23 {dimension_numbers = #tpu.dot_dimension_numbers<[1], [0], [0], [1], [0, 0, 1, 1], [], []>} : vector<18x16xbf16>, vector<16x32xbf16>, vector<18x32xf32> -> vector<18x32xf32>
    %47 = arith.addf %39, %46 : vector<18x32xf32>
    %48 = vector.extract_strided_slice %29 {offsets = [2, 0, 0], sizes = [1, 18, 98], strides = [1, 1, 1]} : vector<9x18x98xbf16> to vector<1x18x98xbf16>
    %49 = vector.shape_cast %48 : vector<1x18x98xbf16> to vector<18x98xbf16>
    %cst_24 = arith.constant dense<0.000000e+00> : vector<18x16xf32>
    %50 = tpu.matmul %49, %28, %cst_24 {dimension_numbers = #tpu.dot_dimension_numbers<[1], [0], [0], [1], [0, 0, 1, 1], [], []>} : vector<18x98xbf16>, vector<98x16xbf16>, vector<18x16xf32> -> vector<18x16xf32>
    %51 = arith.truncf %50 : vector<18x16xf32> to vector<18x16xbf16>
    %52 = vector.extract_strided_slice %30 {offsets = [2, 0, 0], sizes = [1, 16, 32], strides = [1, 1, 1]} : vector<9x16x32xbf16> to vector<1x16x32xbf16>
    %53 = vector.shape_cast %52 : vector<1x16x32xbf16> to vector<16x32xbf16>
    %cst_25 = arith.constant dense<0.000000e+00> : vector<18x32xf32>
    %54 = tpu.matmul %51, %53, %cst_25 {dimension_numbers = #tpu.dot_dimension_numbers<[1], [0], [0], [1], [0, 0, 1, 1], [], []>} : vector<18x16xbf16>, vector<16x32xbf16>, vector<18x32xf32> -> vector<18x32xf32>
    %55 = arith.addf %47, %54 : vector<18x32xf32>
    %56 = vector.extract_strided_slice %29 {offsets = [3, 0, 0], sizes = [1, 18, 98], strides = [1, 1, 1]} : vector<9x18x98xbf16> to vector<1x18x98xbf16>
    %57 = vector.shape_cast %56 : vector<1x18x98xbf16> to vector<18x98xbf16>
    %cst_26 = arith.constant dense<0.000000e+00> : vector<18x16xf32>
    %58 = tpu.matmul %57, %28, %cst_26 {dimension_numbers = #tpu.dot_dimension_numbers<[1], [0], [0], [1], [0, 0, 1, 1], [], []>} : vector<18x98xbf16>, vector<98x16xbf16>, vector<18x16xf32> -> vector<18x16xf32>
    %59 = arith.truncf %58 : vector<18x16xf32> to vector<18x16xbf16>
    %60 = vector.extract_strided_slice %30 {offsets = [3, 0, 0], sizes = [1, 16, 32], strides = [1, 1, 1]} : vector<9x16x32xbf16> to vector<1x16x32xbf16>
    %61 = vector.shape_cast %60 : vector<1x16x32xbf16> to vector<16x32xbf16>
    %cst_27 = arith.constant dense<0.000000e+00> : vector<18x32xf32>
    %62 = tpu.matmul %59, %61, %cst_27 {dimension_numbers = #tpu.dot_dimension_numbers<[1], [0], [0], [1], [0, 0, 1, 1], [], []>} : vector<18x16xbf16>, vector<16x32xbf16>, vector<18x32xf32> -> vector<18x32xf32>
    %63 = arith.addf %55, %62 : vector<18x32xf32>
    %64 = vector.extract_strided_slice %29 {offsets = [4, 0, 0], sizes = [1, 18, 98], strides = [1, 1, 1]} : vector<9x18x98xbf16> to vector<1x18x98xbf16>
    %65 = vector.shape_cast %64 : vector<1x18x98xbf16> to vector<18x98xbf16>
    %cst_28 = arith.constant dense<0.000000e+00> : vector<18x16xf32>
    %66 = tpu.matmul %65, %28, %cst_28 {dimension_numbers = #tpu.dot_dimension_numbers<[1], [0], [0], [1], [0, 0, 1, 1], [], []>} : vector<18x98xbf16>, vector<98x16xbf16>, vector<18x16xf32> -> vector<18x16xf32>
    %67 = arith.truncf %66 : vector<18x16xf32> to vector<18x16xbf16>
    %68 = vector.extract_strided_slice %30 {offsets = [4, 0, 0], sizes = [1, 16, 32], strides = [1, 1, 1]} : vector<9x16x32xbf16> to vector<1x16x32xbf16>
    %69 = vector.shape_cast %68 : vector<1x16x32xbf16> to vector<16x32xbf16>
    %cst_29 = arith.constant dense<0.000000e+00> : vector<18x32xf32>
    %70 = tpu.matmul %67, %69, %cst_29 {dimension_numbers = #tpu.dot_dimension_numbers<[1], [0], [0], [1], [0, 0, 1, 1], [], []>} : vector<18x16xbf16>, vector<16x32xbf16>, vector<18x32xf32> -> vector<18x32xf32>
    %71 = arith.addf %63, %70 : vector<18x32xf32>
    %72 = vector.extract_strided_slice %29 {offsets = [5, 0, 0], sizes = [1, 18, 98], strides = [1, 1, 1]} : vector<9x18x98xbf16> to vector<1x18x98xbf16>
    %73 = vector.shape_cast %72 : vector<1x18x98xbf16> to vector<18x98xbf16>
    %cst_30 = arith.constant dense<0.000000e+00> : vector<18x16xf32>
    %74 = tpu.matmul %73, %28, %cst_30 {dimension_numbers = #tpu.dot_dimension_numbers<[1], [0], [0], [1], [0, 0, 1, 1], [], []>} : vector<18x98xbf16>, vector<98x16xbf16>, vector<18x16xf32> -> vector<18x16xf32>
    %75 = arith.truncf %74 : vector<18x16xf32> to vector<18x16xbf16>
    %76 = vector.extract_strided_slice %30 {offsets = [5, 0, 0], sizes = [1, 16, 32], strides = [1, 1, 1]} : vector<9x16x32xbf16> to vector<1x16x32xbf16>
    %77 = vector.shape_cast %76 : vector<1x16x32xbf16> to vector<16x32xbf16>
    %cst_31 = arith.constant dense<0.000000e+00> : vector<18x32xf32>
    %78 = tpu.matmul %75, %77, %cst_31 {dimension_numbers = #tpu.dot_dimension_numbers<[1], [0], [0], [1], [0, 0, 1, 1], [], []>} : vector<18x16xbf16>, vector<16x32xbf16>, vector<18x32xf32> -> vector<18x32xf32>
    %79 = arith.addf %71, %78 : vector<18x32xf32>
    %80 = vector.extract_strided_slice %29 {offsets = [6, 0, 0], sizes = [1, 18, 98], strides = [1, 1, 1]} : vector<9x18x98xbf16> to vector<1x18x98xbf16>
    %81 = vector.shape_cast %80 : vector<1x18x98xbf16> to vector<18x98xbf16>
    %cst_32 = arith.constant dense<0.000000e+00> : vector<18x16xf32>
    %82 = tpu.matmul %81, %28, %cst_32 {dimension_numbers = #tpu.dot_dimension_numbers<[1], [0], [0], [1], [0, 0, 1, 1], [], []>} : vector<18x98xbf16>, vector<98x16xbf16>, vector<18x16xf32> -> vector<18x16xf32>
    %83 = arith.truncf %82 : vector<18x16xf32> to vector<18x16xbf16>
    %84 = vector.extract_strided_slice %30 {offsets = [6, 0, 0], sizes = [1, 16, 32], strides = [1, 1, 1]} : vector<9x16x32xbf16> to vector<1x16x32xbf16>
    %85 = vector.shape_cast %84 : vector<1x16x32xbf16> to vector<16x32xbf16>
    %cst_33 = arith.constant dense<0.000000e+00> : vector<18x32xf32>
    %86 = tpu.matmul %83, %85, %cst_33 {dimension_numbers = #tpu.dot_dimension_numbers<[1], [0], [0], [1], [0, 0, 1, 1], [], []>} : vector<18x16xbf16>, vector<16x32xbf16>, vector<18x32xf32> -> vector<18x32xf32>
    %87 = arith.addf %79, %86 : vector<18x32xf32>
    %88 = vector.extract_strided_slice %29 {offsets = [7, 0, 0], sizes = [1, 18, 98], strides = [1, 1, 1]} : vector<9x18x98xbf16> to vector<1x18x98xbf16>
    %89 = vector.shape_cast %88 : vector<1x18x98xbf16> to vector<18x98xbf16>
    %cst_34 = arith.constant dense<0.000000e+00> : vector<18x16xf32>
    %90 = tpu.matmul %89, %28, %cst_34 {dimension_numbers = #tpu.dot_dimension_numbers<[1], [0], [0], [1], [0, 0, 1, 1], [], []>} : vector<18x98xbf16>, vector<98x16xbf16>, vector<18x16xf32> -> vector<18x16xf32>
    %91 = arith.truncf %90 : vector<18x16xf32> to vector<18x16xbf16>
    %92 = vector.extract_strided_slice %30 {offsets = [7, 0, 0], sizes = [1, 16, 32], strides = [1, 1, 1]} : vector<9x16x32xbf16> to vector<1x16x32xbf16>
    %93 = vector.shape_cast %92 : vector<1x16x32xbf16> to vector<16x32xbf16>
    %cst_35 = arith.constant dense<0.000000e+00> : vector<18x32xf32>
    %94 = tpu.matmul %91, %93, %cst_35 {dimension_numbers = #tpu.dot_dimension_numbers<[1], [0], [0], [1], [0, 0, 1, 1], [], []>} : vector<18x16xbf16>, vector<16x32xbf16>, vector<18x32xf32> -> vector<18x32xf32>
    %95 = arith.addf %87, %94 : vector<18x32xf32>
    %96 = vector.extract_strided_slice %29 {offsets = [8, 0, 0], sizes = [1, 18, 98], strides = [1, 1, 1]} : vector<9x18x98xbf16> to vector<1x18x98xbf16>
    %97 = vector.shape_cast %96 : vector<1x18x98xbf16> to vector<18x98xbf16>
    %cst_36 = arith.constant dense<0.000000e+00> : vector<18x16xf32>
    %98 = tpu.matmul %97, %28, %cst_36 {dimension_numbers = #tpu.dot_dimension_numbers<[1], [0], [0], [1], [0, 0, 1, 1], [], []>} : vector<18x98xbf16>, vector<98x16xbf16>, vector<18x16xf32> -> vector<18x16xf32>
    %99 = arith.truncf %98 : vector<18x16xf32> to vector<18x16xbf16>
    %100 = vector.extract_strided_slice %30 {offsets = [8, 0, 0], sizes = [1, 16, 32], strides = [1, 1, 1]} : vector<9x16x32xbf16> to vector<1x16x32xbf16>
    %101 = vector.shape_cast %100 : vector<1x16x32xbf16> to vector<16x32xbf16>
    %cst_37 = arith.constant dense<0.000000e+00> : vector<18x32xf32>
    %102 = tpu.matmul %99, %101, %cst_37 {dimension_numbers = #tpu.dot_dimension_numbers<[1], [0], [0], [1], [0, 0, 1, 1], [], []>} : vector<18x16xbf16>, vector<16x32xbf16>, vector<18x32xf32> -> vector<18x32xf32>
    %103 = arith.addf %95, %102 : vector<18x32xf32>
    %c0_38 = arith.constant 0 : index
    %c0_39 = arith.constant 0 : index
    %104 = vector.load %arg7[%c0_38, %c0_39] : memref<1x32xf32, #tpu.memory_space<vmem>>, vector<1x32xf32>
    %c0_40 = arith.constant 0 : index
    %c0_41 = arith.constant 0 : index
    %105 = vector.load %arg8[%c0_40, %c0_41] : memref<1x32xf32, #tpu.memory_space<vmem>>, vector<1x32xf32>
    %cst_42 = arith.constant dense<0.000000e+00> : vector<32xf32>
    %106 = vector.multi_reduction <add>, %103, %cst_42 [0] : vector<18x32xf32> to vector<32xf32>
    %107 = vector.shape_cast %106 : vector<32xf32> to vector<1x32xf32>
    %cst_43 = arith.constant 0.055555556 : f32
    %108 = vector.broadcast %cst_43 : f32 to vector<1x32xf32>
    %109 = arith.mulf %107, %108 : vector<1x32xf32>
    %110 = vector.broadcast %109 : vector<1x32xf32> to vector<18x32xf32>
    %111 = arith.subf %103, %110 : vector<18x32xf32>
    %112 = arith.mulf %111, %111 : vector<18x32xf32>
    %cst_44 = arith.constant dense<0.000000e+00> : vector<32xf32>
    %113 = vector.multi_reduction <add>, %112, %cst_44 [0] : vector<18x32xf32> to vector<32xf32>
    %114 = vector.shape_cast %113 : vector<32xf32> to vector<1x32xf32>
    %cst_45 = arith.constant 0.055555556 : f32
    %115 = vector.broadcast %cst_45 : f32 to vector<1x32xf32>
    %116 = arith.mulf %114, %115 : vector<1x32xf32>
    %cst_46 = arith.constant 9.99999974E-6 : f32
    %117 = vector.broadcast %cst_46 : f32 to vector<1x32xf32>
    %118 = arith.addf %116, %117 : vector<1x32xf32>
    %119 = math.rsqrt %118 : vector<1x32xf32>
    %120 = arith.mulf %104, %119 : vector<1x32xf32>
    %121 = arith.mulf %109, %120 : vector<1x32xf32>
    %122 = arith.subf %105, %121 : vector<1x32xf32>
    %123 = vector.broadcast %120 : vector<1x32xf32> to vector<18x32xf32>
    %124 = arith.mulf %103, %123 : vector<18x32xf32>
    %125 = vector.broadcast %122 : vector<1x32xf32> to vector<18x32xf32>
    %126 = arith.addf %124, %125 : vector<18x32xf32>
    %cst_47 = arith.constant 0.000000e+00 : f32
    %127 = vector.broadcast %cst_47 : f32 to vector<18x32xf32>
    %128 = arith.maximumf %126, %127 : vector<18x32xf32>
    %129 = vector.extract_strided_slice %128 {offsets = [0, 0], sizes = [9, 32], strides = [1, 1]} : vector<18x32xf32> to vector<9x32xf32>
    %c0_48 = arith.constant 0 : index
    %c0_49 = arith.constant 0 : index
    %c0_50 = arith.constant 0 : index
    %130 = vector.load %arg9[%c0_48, %c0_49, %c0_50] : memref<2x9x32xf32, #tpu.memory_space<vmem>>, vector<1x9x32xf32>
    %131 = vector.shape_cast %130 : vector<1x9x32xf32> to vector<9x32xf32>
    %132 = vector.shape_cast %129 : vector<9x32xf32> to vector<1x9x32xf32>
    tpu.vector_store %arg9[%c0_48, %c0_49, %c0_50], %132 {strides = array<i32>} : memref<2x9x32xf32, #tpu.memory_space<vmem>>, vector<1x9x32xf32>,
    %133 = vector.extract_strided_slice %128 {offsets = [9, 0], sizes = [9, 32], strides = [1, 1]} : vector<18x32xf32> to vector<9x32xf32>
    %c1 = arith.constant 1 : index
    %c0_51 = arith.constant 0 : index
    %c0_52 = arith.constant 0 : index
    %134 = vector.load %arg9[%c1, %c0_51, %c0_52] : memref<2x9x32xf32, #tpu.memory_space<vmem>>, vector<1x9x32xf32>
    %135 = vector.shape_cast %134 : vector<1x9x32xf32> to vector<9x32xf32>
    %136 = vector.shape_cast %133 : vector<9x32xf32> to vector<1x9x32xf32>
    tpu.vector_store %arg9[%c1, %c0_51, %c0_52], %136 {strides = array<i32>} : memref<2x9x32xf32, #tpu.memory_space<vmem>>, vector<1x9x32xf32>,
    return
  }
  func.func @transform_0(%arg0: i32) -> (i32, i32) {
    %c0_i32 = arith.constant 0 : i32
    %c0_i32_0 = arith.constant 0 : i32
    %c0_i32_1 = arith.constant 0 : i32
    return %c0_i32, %c0_i32_0 : i32, i32
  }
  func.func @transform_1(%arg0: i32) -> (i32, i32) {
    %c0_i32 = arith.constant 0 : i32
    %c0_i32_0 = arith.constant 0 : i32
    %c0_i32_1 = arith.constant 0 : i32
    return %c0_i32, %c0_i32_0 : i32, i32
  }
  func.func @transform_2(%arg0: i32) -> (i32, i32) {
    %c0_i32 = arith.constant 0 : i32
    %c0_i32_0 = arith.constant 0 : i32
    %c0_i32_1 = arith.constant 0 : i32
    return %c0_i32, %c0_i32_0 : i32, i32
  }
  func.func @transform_3(%arg0: i32) -> (i32, i32) {
    %c0_i32 = arith.constant 0 : i32
    %c0_i32_0 = arith.constant 0 : i32
    %c0_i32_1 = arith.constant 0 : i32
    return %c0_i32, %c0_i32_0 : i32, i32
  }
  func.func @transform_4(%arg0: i32) -> (i32, i32, i32) {
    %c0_i32 = arith.constant 0 : i32
    %c0_i32_0 = arith.constant 0 : i32
    %c0_i32_1 = arith.constant 0 : i32
    %c0_i32_2 = arith.constant 0 : i32
    return %c0_i32, %c0_i32_0, %c0_i32_1 : i32, i32, i32
  }
  func.func @transform_5(%arg0: i32) -> (i32, i32, i32) {
    %c0_i32 = arith.constant 0 : i32
    %c0_i32_0 = arith.constant 0 : i32
    %c0_i32_1 = arith.constant 0 : i32
    %c0_i32_2 = arith.constant 0 : i32
    return %c0_i32, %c0_i32_0, %c0_i32_1 : i32, i32, i32
  }
  func.func @transform_6(%arg0: i32) -> (i32, i32) {
    %c0_i32 = arith.constant 0 : i32
    %c0_i32_0 = arith.constant 0 : i32
    %c0_i32_1 = arith.constant 0 : i32
    return %c0_i32, %c0_i32_0 : i32, i32
  }
  func.func @transform_7(%arg0: i32) -> (i32, i32) {
    %c0_i32 = arith.constant 0 : i32
    %c0_i32_0 = arith.constant 0 : i32
    %c0_i32_1 = arith.constant 0 : i32
    return %c0_i32, %c0_i32_0 : i32, i32
  }
  func.func @transform_8(%arg0: i32) -> (i32, i32, i32) {
    %c0_i32 = arith.constant 0 : i32
    %c0_i32_0 = arith.constant 0 : i32
    %c0_i32_1 = arith.constant 0 : i32
    %c0_i32_2 = arith.constant 0 : i32
    return %c0_i32, %c0_i32_0, %c0_i32_1 : i32, i32, i32
  }
}

</mosaic_0001>

<llo_original>
// kernel: cnn_forward_fn.1
$region0: #{cnn_forward_fn.1}
  #allocation0 [shape = 'u32[]', space=smem, size = 0x4, offset = 0x4, fixed_abs, tag = 'smem constant byte address 0x4 - core index']
  #allocation1 [shape = 'u32[72,128]{1,0:T(1,128)}', space=vmem, size = 0x9000, scoped, tag = 'internal scratch']
  %s0 = inlined_call_operand.vmem [shape: bf16[98,9], index: 0, kind: input, shape index: {}]
  %s1 = inlined_call_operand.vmem [shape: bf16[9,16], index: 1, kind: input, shape index: {}]
  %s2 = inlined_call_operand.vmem [shape: f32[1,16], index: 2, kind: input, shape index: {}]
  %s3 = inlined_call_operand.vmem [shape: f32[1,16], index: 3, kind: input, shape index: {}]
  %s4 = inlined_call_operand.vmem [shape: bf16[9,18,98], index: 4, kind: input, shape index: {}]
  %s5 = inlined_call_operand.vmem [shape: bf16[9,16,32], index: 5, kind: input, shape index: {}]
  %s6 = inlined_call_operand.vmem [shape: f32[1,32], index: 6, kind: input, shape index: {}]
  %s7 = inlined_call_operand.vmem [shape: f32[1,32], index: 7, kind: input, shape index: {}]
  %s8 = inlined_call_operand.vmem [shape: f32[2,9,32], index: 8, kind: output, shape index: {}]
  %s9 = sld [smem:[#allocation0]]
  $region42: #{cnn_forward_fn.1} parent=0
    _
  %s11 = ssub.s32 1, %s9
  %s12 = scalar_select 0, %s11, %s9
  // Predicated region
  $region2: #{cnn_forward_fn.1} parent=0 // pred_check
    _
  $region3: #{cnn_forward_fn.1} parent=0 // pred_check_branch
    %14 = sbr.rel (0) target = $region5
  $region4: #{cnn_forward_fn.1} parent=0 // pred_region
    _
  $region5: #{cnn_forward_fn.1} parent=0 // pred_fallthru
    _
  // Predicated region
  $region6: #{cnn_forward_fn.1} parent=0 // pred_check
    _
  $region7: #{cnn_forward_fn.1} parent=0 // pred_check_branch
    %16 = sbr.rel (0) target = $region9
  $region8: #{cnn_forward_fn.1} parent=0 // pred_region
    _
  $region9: #{cnn_forward_fn.1} parent=0 // pred_fallthru
    _
  // Predicated region
  $region10: #{cnn_forward_fn.1} parent=0 // pred_check
    _
  $region11: #{cnn_forward_fn.1} parent=0 // pred_check_branch
    %18 = sbr.rel (0) target = $region13
  $region12: #{cnn_forward_fn.1} parent=0 // pred_region
    _
  $region13: #{cnn_forward_fn.1} parent=0 // pred_fallthru
    _
  // Predicated region
  $region14: #{cnn_forward_fn.1} parent=0 // pred_check
    _
  $region15: #{cnn_forward_fn.1} parent=0 // pred_check_branch
    %20 = sbr.rel (0) target = $region17
  $region16: #{cnn_forward_fn.1} parent=0 // pred_region
    _
  $region17: #{cnn_forward_fn.1} parent=0 // pred_fallthru
    _
  // Predicated region
  $region18: #{cnn_forward_fn.1} parent=0 // pred_check
    _
  $region19: #{cnn_forward_fn.1} parent=0 // pred_check_branch
    %22 = sbr.rel (0) target = $region21
  $region20: #{cnn_forward_fn.1} parent=0 // pred_region
    _
  $region21: #{cnn_forward_fn.1} parent=0 // pred_fallthru
    _
  // Predicated region
  $region22: #{cnn_forward_fn.1} parent=0 // pred_check
    _
  $region23: #{cnn_forward_fn.1} parent=0 // pred_check_branch
    %24 = sbr.rel (0) target = $region25
  $region24: #{cnn_forward_fn.1} parent=0 // pred_region
    _
  $region25: #{cnn_forward_fn.1} parent=0 // pred_fallthru
    _
  // Predicated region
  $region26: #{cnn_forward_fn.1} parent=0 // pred_check
    _
  $region27: #{cnn_forward_fn.1} parent=0 // pred_check_branch
    %26 = sbr.rel (0) target = $region29
  $region28: #{cnn_forward_fn.1} parent=0 // pred_region
    _
  $region29: #{cnn_forward_fn.1} parent=0 // pred_fallthru
    _
  // Predicated region
  $region30: #{cnn_forward_fn.1} parent=0 // pred_check
    _
  $region31: #{cnn_forward_fn.1} parent=0 // pred_check_branch
    %28 = sbr.rel (0) target = $region33
  $region32: #{cnn_forward_fn.1} parent=0 // pred_region
    _
  $region33: #{cnn_forward_fn.1} parent=0 // pred_fallthru
    _
  %v30 = vld [vmem:[%s0] sm:$0xf]
  %v31 = vld [vmem:[%s0 + $0x4] sm:$0xf]
  %v32 = vld [vmem:[%s0 + $0x8] sm:$0xf]
  %v33 = vld [vmem:[%s0 + $0xc] sm:$0xf]
  %v34 = vld [vmem:[%s0 + $0x10] sm:$0xf]
  %v35 = vld [vmem:[%s0 + $0x14] sm:$0xf]
  %v36 = vld [vmem:[%s0 + $0x18] sm:$0xf]
  %v37 = vld [vmem:[%s0 + $0x1c] sm:$0xf]
  %v38 = vld [vmem:[%s0 + $0x20] sm:$0xf]
  %v39 = vld [vmem:[%s0 + $0x24] sm:$0xf]
  %v40 = vld [vmem:[%s0 + $0x28] sm:$0xf]
  %v41 = vld [vmem:[%s0 + $0x2c] sm:$0xf]
  %v42 = vld [vmem:[%s0 + $0x30] sm:$0x1]
  %v43 = vld [vmem:[%s1] sm:$0xf]
  %v44 = vld [vmem:[%s1 + $0x4] sm:$0x1]
  %v58 = vunpack.c.l.b16 %v30
  %v59 = vunpack.c.l.b16 %v31
  %v60 = vunpack.c.l.b16 %v32
  %v61 = vunpack.c.l.b16 %v33
  %v62 = vunpack.c.l.b16 %v34
  %v63 = vunpack.c.l.b16 %v35
  %v64 = vunpack.c.l.b16 %v36
  %v65 = vunpack.c.l.b16 %v37
  %v66 = vunpack.c.l.b16 %v38
  %v67 = vunpack.c.l.b16 %v39
  %v68 = vunpack.c.l.b16 %v40
  %v69 = vunpack.c.l.b16 %v41
  %v70 = vunpack.c.l.b16 %v42
  %v71 = vpack.c.b16 %v59, %v58
  %v72 = vpack.c.b16 %v61, %v60
  %v73 = vpack.c.b16 %v63, %v62
  %v74 = vpack.c.b16 %v65, %v64
  %v75 = vpack.c.b16 %v67, %v66
  %v76 = vpack.c.b16 %v69, %v68
  %v77 = vpack.c.b16 %v70, %v70
  %v80 = vunpack.c.l.b16 %v43
  %v81 = vunpack.c.l.b16 %v44
  %v82 = vpack.c.b16 %v81, %v80
  %vm83 = vcmask 72704
  %v85 = vsel %vm83, %v71, 0
  %v88 = vsel %vm83, %v72, 0
  %v91 = vsel %vm83, %v73, 0
  %v94 = vsel %vm83, %v74, 0
  %v97 = vsel %vm83, %v75, 0
  %v100 = vsel %vm83, %v76, 0
  %v103 = vsel %vm83, %v77, 0
  %vm105 = vcmask 1043456
  %vm106 = vcmask 1044480
  %v107 = vsel %vm105, 4294967295, 65535
  %v108 = vsel %vm106, %v107, 0
  %v110 = vand.u32 %v82, %v108
  %112 = vmatpush.bf16.msra.mxu0 0
  %113 = vmatpush.bf16.msra.mxu0 0
  %114 = vmatpush.bf16.msra.mxu0 0
  %115 = vmatpush.bf16.msra.mxu0 0
  %116 = vmatpush.bf16.msra.mxu0 0
  %117 = vmatpush.bf16.msra.mxu0 0
  %118 = vmatpush.bf16.msra.mxu0 0
  %119 = vmatpush.bf16.msra.mxu0 %v110
  %120 = vmatmul.bf16.gmra.mxu0 %v85
  %v121 = vpop.f32.mrf.mxu0
  %v122 = vadd.f32 0.0, %v121
  %v123 = vpop.f32.mrf.mxu0
  %v124 = vadd.f32 0.0, %v123
  %125 = vmatmul.bf16.gmra.mxu0 %v88
  %v126 = vpop.f32.mrf.mxu0
  %v127 = vadd.f32 0.0, %v126
  %v128 = vpop.f32.mrf.mxu0
  %v129 = vadd.f32 0.0, %v128
  %130 = vmatmul.bf16.gmra.mxu0 %v91
  %v131 = vpop.f32.mrf.mxu0
  %v132 = vadd.f32 0.0, %v131
  %v133 = vpop.f32.mrf.mxu0
  %v134 = vadd.f32 0.0, %v133
  %135 = vmatmul.bf16.gmra.mxu0 %v94
  %v136 = vpop.f32.mrf.mxu0
  %v137 = vadd.f32 0.0, %v136
  %v138 = vpop.f32.mrf.mxu0
  %v139 = vadd.f32 0.0, %v138
  %140 = vmatmul.bf16.gmra.mxu0 %v97
  %v141 = vpop.f32.mrf.mxu0
  %v142 = vadd.f32 0.0, %v141
  %v143 = vpop.f32.mrf.mxu0
  %v144 = vadd.f32 0.0, %v143
  %145 = vmatmul.bf16.gmra.mxu0 %v100
  %v146 = vpop.f32.mrf.mxu0
  %v147 = vadd.f32 0.0, %v146
  %v148 = vpop.f32.mrf.mxu0
  %v149 = vadd.f32 0.0, %v148
  %150 = vmatmul.bf16.gmra.mxu0 %v103
  %v151 = vpop.f32.mrf.mxu0
  %v152 = vadd.f32 0.0, %v151
  %v153 = vpop.f32.mrf.mxu0
  %154 = vdwg.mxu0
  %v155 = vld [vmem:[%s2] sm:$0x1]
  %v156 = vld [vmem:[%s3] sm:$0x1]
  %vm157 = vcmask 130048
  %v158 = vsel %vm157, %v122, 0.0
  %v159 = vsel %vm157, %v124, 0.0
  %v160 = vadd.f32 %v158, %v159
  %v161 = vsel %vm157, %v127, 0.0
  %v162 = vadd.f32 %v160, %v161
  %v163 = vsel %vm157, %v129, 0.0
  %v164 = vadd.f32 %v162, %v163
  %v165 = vsel %vm157, %v132, 0.0
  %v166 = vadd.f32 %v164, %v165
  %v167 = vsel %vm157, %v134, 0.0
  %v168 = vadd.f32 %v166, %v167
  %v169 = vsel %vm157, %v137, 0.0
  %v170 = vadd.f32 %v168, %v169
  %v171 = vsel %vm157, %v139, 0.0
  %v172 = vadd.f32 %v170, %v171
  %v173 = vsel %vm157, %v142, 0.0
  %v174 = vadd.f32 %v172, %v173
  %v175 = vsel %vm157, %v144, 0.0
  %v176 = vadd.f32 %v174, %v175
  %v177 = vsel %vm157, %v147, 0.0
  %v178 = vadd.f32 %v176, %v177
  %v179 = vsel %vm157, %v149, 0.0
  %v180 = vadd.f32 %v178, %v179
  %vm181 = vcmask 123904
  %v182 = vsel %vm181, %v152, 0.0
  %v183 = vadd.f32 %v180, %v182
  %v184 = vrot.slane %v183, 4
  %v185 = vadd.f32 %v183, %v184
  %v186 = vrot.slane %v185, 2
  %v187 = vadd.f32 %v185, %v186
  %v188 = vrot.slane %v187, 1
  %v189 = vadd.f32 %v187, %v188
  %v190 = vmul.f32 %v189, 0.010204081
  %v191 = vsub.f32 %v122, %v190
  %v192 = vsub.f32 %v124, %v190
  %v193 = vsub.f32 %v127, %v190
  %v194 = vsub.f32 %v129, %v190
  %v195 = vsub.f32 %v132, %v190
  %v196 = vsub.f32 %v134, %v190
  %v197 = vsub.f32 %v137, %v190
  %v198 = vsub.f32 %v139, %v190
  %v199 = vsub.f32 %v142, %v190
  %v200 = vsub.f32 %v144, %v190
  %v201 = vsub.f32 %v147, %v190
  %v202 = vsub.f32 %v149, %v190
  %v203 = vsub.f32 %v152, %v190
  %v204 = vmul.f32 %v191, %v191
  %v205 = vmul.f32 %v192, %v192
  %v206 = vmul.f32 %v193, %v193
  %v207 = vmul.f32 %v194, %v194
  %v208 = vmul.f32 %v195, %v195
  %v209 = vmul.f32 %v196, %v196
  %v210 = vmul.f32 %v197, %v197
  %v211 = vmul.f32 %v198, %v198
  %v212 = vmul.f32 %v199, %v199
  %v213 = vmul.f32 %v200, %v200
  %v214 = vmul.f32 %v201, %v201
  %v215 = vmul.f32 %v202, %v202
  %v216 = vmul.f32 %v203, %v203
  %v217 = vsel %vm157, %v204, 0.0
  %v218 = vsel %vm157, %v205, 0.0
  %v219 = vadd.f32 %v217, %v218
  %v220 = vsel %vm157, %v206, 0.0
  %v221 = vadd.f32 %v219, %v220
  %v222 = vsel %vm157, %v207, 0.0
  %v223 = vadd.f32 %v221, %v222
  %v224 = vsel %vm157, %v208, 0.0
  %v225 = vadd.f32 %v223, %v224
  %v226 = vsel %vm157, %v209, 0.0
  %v227 = vadd.f32 %v225, %v226
  %v228 = vsel %vm157, %v210, 0.0
  %v229 = vadd.f32 %v227, %v228
  %v230 = vsel %vm157, %v211, 0.0
  %v231 = vadd.f32 %v229, %v230
  %v232 = vsel %vm157, %v212, 0.0
  %v233 = vadd.f32 %v231, %v232
  %v234 = vsel %vm157, %v213, 0.0
  %v235 = vadd.f32 %v233, %v234
  %v236 = vsel %vm157, %v214, 0.0
  %v237 = vadd.f32 %v235, %v236
  %v238 = vsel %vm157, %v215, 0.0
  %v239 = vadd.f32 %v237, %v238
  %v240 = vsel %vm181, %v216, 0.0
  %v241 = vadd.f32 %v239, %v240
  %v242 = vrot.slane %v241, 4
  %v243 = vadd.f32 %v241, %v242
  %v244 = vrot.slane %v243, 2
  %v245 = vadd.f32 %v243, %v244
  %v246 = vrot.slane %v245, 1
  %v247 = vadd.f32 %v245, %v246
  %v248 = vmul.f32 %v247, 0.010204081
  %v249 = vadd.f32 %v248, 1e-05
  %v250 = vrsqrt.pop %v249
  %v251 = vmul.f32 %v250, %v249
  %v252 = vmul.f32 %v251, %v250
  %v253 = vmul.f32 0.5, %v252
  %v254 = vsub.f32 1.5, %v253
  %v255 = vmul.f32 %v250, %v254
  %vm256 = vweird.f32 %v249
  %vm257 = vweird.f32 %v250
  %vm258 = vmor %vm256, %vm257
  %v259 = vsel %vm258, %v250, %v255
  %v260 = vmul.f32 %v155, %v259
  %v261 = vmul.f32 %v190, %v260
  %v262 = vsub.f32 %v156, %v261
  %v264 = vperm.slane %v260, 0
  %v266 = vmul.f32 %v122, %v264
  %v267 = vmul.f32 %v124, %v264
  %v268 = vmul.f32 %v127, %v264
  %v269 = vmul.f32 %v129, %v264
  %v270 = vmul.f32 %v132, %v264
  %v271 = vmul.f32 %v134, %v264
  %v272 = vmul.f32 %v137, %v264
  %v273 = vmul.f32 %v139, %v264
  %v274 = vmul.f32 %v142, %v264
  %v275 = vmul.f32 %v144, %v264
  %v276 = vmul.f32 %v147, %v264
  %v277 = vmul.f32 %v149, %v264
  %v278 = vmul.f32 %v152, %v264
  %v280 = vperm.slane %v262, 0
  %v282 = vadd.f32 %v266, %v280
  %v283 = vadd.f32 %v267, %v280
  %v284 = vadd.f32 %v268, %v280
  %v285 = vadd.f32 %v269, %v280
  %v286 = vadd.f32 %v270, %v280
  %v287 = vadd.f32 %v271, %v280
  %v288 = vadd.f32 %v272, %v280
  %v289 = vadd.f32 %v273, %v280
  %v290 = vadd.f32 %v274, %v280
  %v291 = vadd.f32 %v275, %v280
  %v292 = vadd.f32 %v276, %v280
  %v293 = vadd.f32 %v277, %v280
  %v294 = vadd.f32 %v278, %v280
  %v295 = vmax.f32 %v282, 0.0
  %v296 = vmax.f32 %v283, 0.0
  %v297 = vmax.f32 %v284, 0.0
  %v298 = vmax.f32 %v285, 0.0
  %v299 = vmax.f32 %v286, 0.0
  %v300 = vmax.f32 %v287, 0.0
  %v301 = vmax.f32 %v288, 0.0
  %v302 = vmax.f32 %v289, 0.0
  %v303 = vmax.f32 %v290, 0.0
  %v304 = vmax.f32 %v291, 0.0
  %v305 = vmax.f32 %v292, 0.0
  %v306 = vmax.f32 %v293, 0.0
  %v307 = vmax.f32 %v294, 0.0
  %v308 = vpack.c.bf16 %v296, %v295
  %v309 = vpack.c.bf16 %v298, %v297
  %v310 = vpack.c.bf16 %v300, %v299
  %v311 = vpack.c.bf16 %v302, %v301
  %v312 = vpack.c.bf16 %v304, %v303
  %v313 = vpack.c.bf16 %v306, %v305
  %v314 = vpack.c.bf16 %v307, %v307
  %v315 = vld [vmem:[%s4] sm:$0xf]
  %v316 = vld [vmem:[%s4 + $0x4] sm:$0xf]
  %v317 = vld [vmem:[%s4 + $0x8] sm:$0x1]
  %v318 = vld [vmem:[%s4 + $0xc] sm:$0xf]
  %v319 = vld [vmem:[%s4 + $0x10] sm:$0xf]
  %v320 = vld [vmem:[%s4 + $0x14] sm:$0x1]
  %v321 = vld [vmem:[%s4 + $0x18] sm:$0xf]
  %v322 = vld [vmem:[%s4 + $0x1c] sm:$0xf]
  %v323 = vld [vmem:[%s4 + $0x20] sm:$0x1]
  %v324 = vld [vmem:[%s4 + $0x24] sm:$0xf]
  %v325 = vld [vmem:[%s4 + $0x28] sm:$0xf]
  %v326 = vld [vmem:[%s4 + $0x2c] sm:$0x1]
  %v327 = vld [vmem:[%s4 + $0x30] sm:$0xf]
  %v328 = vld [vmem:[%s4 + $0x34] sm:$0xf]
  %v329 = vld [vmem:[%s4 + $0x38] sm:$0x1]
  %v330 = vld [vmem:[%s4 + $0x3c] sm:$0xf]
  %v331 = vld [vmem:[%s4 + $0x40] sm:$0xf]
  %v332 = vld [vmem:[%s4 + $0x44] sm:$0x1]
  %v333 = vld [vmem:[%s4 + $0x48] sm:$0xf]
  %v334 = vld [vmem:[%s4 + $0x4c] sm:$0xf]
  %v335 = vld [vmem:[%s4 + $0x50] sm:$0x1]
  %v336 = vld [vmem:[%s4 + $0x54] sm:$0xf]
  %v337 = vld [vmem:[%s4 + $0x58] sm:$0xf]
  %v338 = vld [vmem:[%s4 + $0x5c] sm:$0x1]
  %v339 = vld [vmem:[%s4 + $0x60] sm:$0xf]
  %v340 = vld [vmem:[%s4 + $0x64] sm:$0xf]
  %v341 = vld [vmem:[%s4 + $0x68] sm:$0x1]
  %v342 = vld [vmem:[%s5] sm:$0xf]
  %v343 = vld [vmem:[%s5 + $0x4] sm:$0xf]
  %v344 = vld [vmem:[%s5 + $0x8] sm:$0xf]
  %v345 = vld [vmem:[%s5 + $0xc] sm:$0xf]
  %v346 = vld [vmem:[%s5 + $0x10] sm:$0xf]
  %v347 = vld [vmem:[%s5 + $0x14] sm:$0xf]
  %v348 = vld [vmem:[%s5 + $0x18] sm:$0xf]
  %v349 = vld [vmem:[%s5 + $0x1c] sm:$0xf]
  %v350 = vld [vmem:[%s5 + $0x20] sm:$0xf]
  %v351 = vld [vmem:[%s5 + $0x24] sm:$0xf]
  %v352 = vld [vmem:[%s5 + $0x28] sm:$0xf]
  %v353 = vld [vmem:[%s5 + $0x2c] sm:$0xf]
  %v354 = vld [vmem:[%s5 + $0x30] sm:$0xf]
  %v355 = vld [vmem:[%s5 + $0x34] sm:$0xf]
  %v356 = vld [vmem:[%s5 + $0x38] sm:$0xf]
  %v357 = vld [vmem:[%s5 + $0x3c] sm:$0xf]
  %v358 = vld [vmem:[%s5 + $0x40] sm:$0xf]
  %v359 = vld [vmem:[%s5 + $0x44] sm:$0xf]
  %v363 = vunpack.c.l.b16 %v315
  %v364 = vunpack.c.l.b16 %v316
  %v365 = vunpack.c.l.b16 %v317
  %v366 = vpack.c.b16 %v364, %v363
  %v367 = vpack.c.b16 %v365, %v365
  %vm368 = vcmask 801792
  %v370 = vsel %vm368, %v366, 0
  %v373 = vsel %vm368, %v367, 0
  %vm375 = vcmask 1040384
  %v377 = vsel %vm375, %v314, 0
  %379 = vmatpush.bf16.msra.mxu0 0
  %380 = vmatpush.bf16.msra.mxu0 %v377
  %381 = vmatpush.bf16.msra.mxu0 %v313
  %382 = vmatpush.bf16.msra.mxu0 %v312
  %383 = vmatpush.bf16.msra.mxu0 %v311
  %384 = vmatpush.bf16.msra.mxu0 %v310
  %385 = vmatpush.bf16.msra.mxu0 %v309
  %386 = vmatpush.bf16.msra.mxu0 %v308
  %387 = vmatmul.bf16.gmra.mxu0 %v370
  %v388 = vpop.f32.mrf.mxu0
  %v389 = vadd.f32 0.0, %v388
  %v390 = vpop.f32.mrf.mxu0
  %v391 = vadd.f32 0.0, %v390
  %392 = vmatmul.bf16.gmra.mxu0 %v373
  %v393 = vpop.f32.mrf.mxu0
  %v394 = vadd.f32 0.0, %v393
  %v395 = vpop.f32.mrf.mxu0
  %396 = vdwg.mxu0
  %v397 = vpack.c.bf16 %v391, %v389
  %v398 = vpack.c.bf16 %v394, %v394
  %v402 = vunpack.c.l.b16 %v318
  %v403 = vunpack.c.l.b16 %v319
  %v404 = vunpack.c.l.b16 %v320
  %v405 = vpack.c.b16 %v403, %v402
  %v406 = vpack.c.b16 %v404, %v404
  %v408 = vsel %vm368, %v405, 0
  %v411 = vsel %vm368, %v406, 0
  %413 = vmatpush.bf16.msra.mxu0 0
  %414 = vmatpush.bf16.msra.mxu0 %v377
  %415 = vmatpush.bf16.msra.mxu0 %v313
  %416 = vmatpush.bf16.msra.mxu0 %v312
  %417 = vmatpush.bf16.msra.mxu0 %v311
  %418 = vmatpush.bf16.msra.mxu0 %v310
  %419 = vmatpush.bf16.msra.mxu0 %v309
  %420 = vmatpush.bf16.msra.mxu0 %v308
  %421 = vmatmul.bf16.gmra.mxu0 %v408
  %v422 = vpop.f32.mrf.mxu0
  %v423 = vadd.f32 0.0, %v422
  %v424 = vpop.f32.mrf.mxu0
  %v425 = vadd.f32 0.0, %v424
  %426 = vmatmul.bf16.gmra.mxu0 %v411
  %v427 = vpop.f32.mrf.mxu0
  %v428 = vadd.f32 0.0, %v427
  %v429 = vpop.f32.mrf.mxu0
  %430 = vdwg.mxu0
  %v431 = vpack.c.bf16 %v425, %v423
  %v432 = vpack.c.bf16 %v428, %v428
  %v435 = vunpack.c.l.b16 %v344
  %v436 = vunpack.c.l.b16 %v345
  %v437 = vpack.c.b16 %v436, %v435
  %v440 = vsel %vm157, %v431, 0
  %v443 = vsel %vm157, %v432, 0
  %445 = vmatpush.bf16.msra.mxu0 0
  %446 = vmatpush.bf16.msra.mxu0 0
  %447 = vmatpush.bf16.msra.mxu0 0
  %448 = vmatpush.bf16.msra.mxu0 0
  %449 = vmatpush.bf16.msra.mxu0 0
  %450 = vmatpush.bf16.msra.mxu0 0
  %451 = vmatpush.bf16.msra.mxu0 0
  %452 = vmatpush.bf16.msra.mxu0 %v437
  %453 = vmatmul.bf16.gmra.mxu0 %v440
  %v454 = vpop.f32.mrf.mxu0
  %v455 = vadd.f32 0.0, %v454
  %v456 = vpop.f32.mrf.mxu0
  %v457 = vadd.f32 0.0, %v456
  %458 = vmatmul.bf16.gmra.mxu0 %v443
  %v459 = vpop.f32.mrf.mxu0
  %v460 = vadd.f32 0.0, %v459
  %v461 = vpop.f32.mrf.mxu0
  %462 = vdwg.mxu0
  %v465 = vunpack.c.l.b16 %v342
  %v466 = vunpack.c.l.b16 %v343
  %v467 = vpack.c.b16 %v466, %v465
  %v470 = vsel %vm157, %v397, 0
  %v473 = vsel %vm157, %v398, 0
  %475 = vmatpush.bf16.msra.mxu0 0
  %476 = vmatpush.bf16.msra.mxu0 0
  %477 = vmatpush.bf16.msra.mxu0 0
  %478 = vmatpush.bf16.msra.mxu0 0
  %479 = vmatpush.bf16.msra.mxu0 0
  %480 = vmatpush.bf16.msra.mxu0 0
  %481 = vmatpush.bf16.msra.mxu0 0
  %482 = vmatpush.bf16.msra.mxu0 %v467
  %483 = vmatmul.bf16.gmra.mxu0 %v470
  %v484 = vpop.f32.mrf.mxu0
  %v485 = vadd.f32 %v455, %v484
  %v486 = vpop.f32.mrf.mxu0
  %v487 = vadd.f32 %v457, %v486
  %488 = vmatmul.bf16.gmra.mxu0 %v473
  %v489 = vpop.f32.mrf.mxu0
  %v490 = vadd.f32 %v460, %v489
  %v491 = vpop.f32.mrf.mxu0
  %492 = vdwg.mxu0
  %v496 = vunpack.c.l.b16 %v321
  %v497 = vunpack.c.l.b16 %v322
  %v498 = vunpack.c.l.b16 %v323
  %v499 = vpack.c.b16 %v497, %v496
  %v500 = vpack.c.b16 %v498, %v498
  %v502 = vsel %vm368, %v499, 0
  %v505 = vsel %vm368, %v500, 0
  %507 = vmatpush.bf16.msra.mxu0 0
  %508 = vmatpush.bf16.msra.mxu0 %v377
  %509 = vmatpush.bf16.msra.mxu0 %v313
  %510 = vmatpush.bf16.msra.mxu0 %v312
  %511 = vmatpush.bf16.msra.mxu0 %v311
  %512 = vmatpush.bf16.msra.mxu0 %v310
  %513 = vmatpush.bf16.msra.mxu0 %v309
  %514 = vmatpush.bf16.msra.mxu0 %v308
  %515 = vmatmul.bf16.gmra.mxu0 %v502
  %v516 = vpop.f32.mrf.mxu0
  %v517 = vadd.f32 0.0, %v516
  %v518 = vpop.f32.mrf.mxu0
  %v519 = vadd.f32 0.0, %v518
  %520 = vmatmul.bf16.gmra.mxu0 %v505
  %v521 = vpop.f32.mrf.mxu0
  %v522 = vadd.f32 0.0, %v521
  %v523 = vpop.f32.mrf.mxu0
  %524 = vdwg.mxu0
  %v525 = vpack.c.bf16 %v519, %v517
  %v526 = vpack.c.bf16 %v522, %v522
  %v529 = vunpack.c.l.b16 %v346
  %v530 = vunpack.c.l.b16 %v347
  %v531 = vpack.c.b16 %v530, %v529
  %v534 = vsel %vm157, %v525, 0
  %v537 = vsel %vm157, %v526, 0
  %539 = vmatpush.bf16.msra.mxu0 0
  %540 = vmatpush.bf16.msra.mxu0 0
  %541 = vmatpush.bf16.msra.mxu0 0
  %542 = vmatpush.bf16.msra.mxu0 0
  %543 = vmatpush.bf16.msra.mxu0 0
  %544 = vmatpush.bf16.msra.mxu0 0
  %545 = vmatpush.bf16.msra.mxu0 0
  %546 = vmatpush.bf16.msra.mxu0 %v531
  %547 = vmatmul.bf16.gmra.mxu0 %v534
  %v548 = vpop.f32.mrf.mxu0
  %v549 = vadd.f32 0.0, %v548
  %v550 = vpop.f32.mrf.mxu0
  %v551 = vadd.f32 0.0, %v550
  %552 = vmatmul.bf16.gmra.mxu0 %v537
  %v553 = vpop.f32.mrf.mxu0
  %v554 = vadd.f32 0.0, %v553
  %v555 = vpop.f32.mrf.mxu0
  %556 = vdwg.mxu0
  %v557 = vadd.f32 %v485, %v549
  %v558 = vadd.f32 %v487, %v551
  %v559 = vadd.f32 %v490, %v554
  %v563 = vunpack.c.l.b16 %v324
  %v564 = vunpack.c.l.b16 %v325
  %v565 = vunpack.c.l.b16 %v326
  %v566 = vpack.c.b16 %v564, %v563
  %v567 = vpack.c.b16 %v565, %v565
  %v569 = vsel %vm368, %v566, 0
  %v572 = vsel %vm368, %v567, 0
  %574 = vmatpush.bf16.msra.mxu0 0
  %575 = vmatpush.bf16.msra.mxu0 %v377
  %576 = vmatpush.bf16.msra.mxu0 %v313
  %577 = vmatpush.bf16.msra.mxu0 %v312
  %578 = vmatpush.bf16.msra.mxu0 %v311
  %579 = vmatpush.bf16.msra.mxu0 %v310
  %580 = vmatpush.bf16.msra.mxu0 %v309
  %581 = vmatpush.bf16.msra.mxu0 %v308
  %582 = vmatmul.bf16.gmra.mxu0 %v569
  %v583 = vpop.f32.mrf.mxu0
  %v584 = vadd.f32 0.0, %v583
  %v585 = vpop.f32.mrf.mxu0
  %v586 = vadd.f32 0.0, %v585
  %587 = vmatmul.bf16.gmra.mxu0 %v572
  %v588 = vpop.f32.mrf.mxu0
  %v589 = vadd.f32 0.0, %v588
  %v590 = vpop.f32.mrf.mxu0
  %591 = vdwg.mxu0
  %v592 = vpack.c.bf16 %v586, %v584
  %v593 = vpack.c.bf16 %v589, %v589
  %v596 = vunpack.c.l.b16 %v348
  %v597 = vunpack.c.l.b16 %v349
  %v598 = vpack.c.b16 %v597, %v596
  %v601 = vsel %vm157, %v592, 0
  %v604 = vsel %vm157, %v593, 0
  %606 = vmatpush.bf16.msra.mxu0 0
  %607 = vmatpush.bf16.msra.mxu0 0
  %608 = vmatpush.bf16.msra.mxu0 0
  %609 = vmatpush.bf16.msra.mxu0 0
  %610 = vmatpush.bf16.msra.mxu0 0
  %611 = vmatpush.bf16.msra.mxu0 0
  %612 = vmatpush.bf16.msra.mxu0 0
  %613 = vmatpush.bf16.msra.mxu0 %v598
  %614 = vmatmul.bf16.gmra.mxu0 %v601
  %v615 = vpop.f32.mrf.mxu0
  %v616 = vadd.f32 0.0, %v615
  %v617 = vpop.f32.mrf.mxu0
  %v618 = vadd.f32 0.0, %v617
  %619 = vmatmul.bf16.gmra.mxu0 %v604
  %v620 = vpop.f32.mrf.mxu0
  %v621 = vadd.f32 0.0, %v620
  %v622 = vpop.f32.mrf.mxu0
  %623 = vdwg.mxu0
  %v624 = vadd.f32 %v557, %v616
  %v625 = vadd.f32 %v558, %v618
  %v626 = vadd.f32 %v559, %v621
  %v630 = vunpack.c.l.b16 %v327
  %v631 = vunpack.c.l.b16 %v328
  %v632 = vunpack.c.l.b16 %v329
  %v633 = vpack.c.b16 %v631, %v630
  %v634 = vpack.c.b16 %v632, %v632
  %v636 = vsel %vm368, %v633, 0
  %v639 = vsel %vm368, %v634, 0
  %641 = vmatpush.bf16.msra.mxu0 0
  %642 = vmatpush.bf16.msra.mxu0 %v377
  %643 = vmatpush.bf16.msra.mxu0 %v313
  %644 = vmatpush.bf16.msra.mxu0 %v312
  %645 = vmatpush.bf16.msra.mxu0 %v311
  %646 = vmatpush.bf16.msra.mxu0 %v310
  %647 = vmatpush.bf16.msra.mxu0 %v309
  %648 = vmatpush.bf16.msra.mxu0 %v308
  %649 = vmatmul.bf16.gmra.mxu0 %v636
  %v650 = vpop.f32.mrf.mxu0
  %v651 = vadd.f32 0.0, %v650
  %v652 = vpop.f32.mrf.mxu0
  %v653 = vadd.f32 0.0, %v652
  %654 = vmatmul.bf16.gmra.mxu0 %v639
  %v655 = vpop.f32.mrf.mxu0
  %v656 = vadd.f32 0.0, %v655
  %v657 = vpop.f32.mrf.mxu0
  %658 = vdwg.mxu0
  %v659 = vpack.c.bf16 %v653, %v651
  %v660 = vpack.c.bf16 %v656, %v656
  %v663 = vunpack.c.l.b16 %v350
  %v664 = vunpack.c.l.b16 %v351
  %v665 = vpack.c.b16 %v664, %v663
  %v668 = vsel %vm157, %v659, 0
  %v671 = vsel %vm157, %v660, 0
  %673 = vmatpush.bf16.msra.mxu0 0
  %674 = vmatpush.bf16.msra.mxu0 0
  %675 = vmatpush.bf16.msra.mxu0 0
  %676 = vmatpush.bf16.msra.mxu0 0
  %677 = vmatpush.bf16.msra.mxu0 0
  %678 = vmatpush.bf16.msra.mxu0 0
  %679 = vmatpush.bf16.msra.mxu0 0
  %680 = vmatpush.bf16.msra.mxu0 %v665
  %681 = vmatmul.bf16.gmra.mxu0 %v668
  %v682 = vpop.f32.mrf.mxu0
  %v683 = vadd.f32 0.0, %v682
  %v684 = vpop.f32.mrf.mxu0
  %v685 = vadd.f32 0.0, %v684
  %686 = vmatmul.bf16.gmra.mxu0 %v671
  %v687 = vpop.f32.mrf.mxu0
  %v688 = vadd.f32 0.0, %v687
  %v689 = vpop.f32.mrf.mxu0
  %690 = vdwg.mxu0
  %v691 = vadd.f32 %v624, %v683
  %v692 = vadd.f32 %v625, %v685
  %v693 = vadd.f32 %v626, %v688
  %v697 = vunpack.c.l.b16 %v330
  %v698 = vunpack.c.l.b16 %v331
  %v699 = vunpack.c.l.b16 %v332
  %v700 = vpack.c.b16 %v698, %v697
  %v701 = vpack.c.b16 %v699, %v699
  %v703 = vsel %vm368, %v700, 0
  %v706 = vsel %vm368, %v701, 0
  %708 = vmatpush.bf16.msra.mxu0 0
  %709 = vmatpush.bf16.msra.mxu0 %v377
  %710 = vmatpush.bf16.msra.mxu0 %v313
  %711 = vmatpush.bf16.msra.mxu0 %v312
  %712 = vmatpush.bf16.msra.mxu0 %v311
  %713 = vmatpush.bf16.msra.mxu0 %v310
  %714 = vmatpush.bf16.msra.mxu0 %v309
  %715 = vmatpush.bf16.msra.mxu0 %v308
  %716 = vmatmul.bf16.gmra.mxu0 %v703
  %v717 = vpop.f32.mrf.mxu0
  %v718 = vadd.f32 0.0, %v717
  %v719 = vpop.f32.mrf.mxu0
  %v720 = vadd.f32 0.0, %v719
  %721 = vmatmul.bf16.gmra.mxu0 %v706
  %v722 = vpop.f32.mrf.mxu0
  %v723 = vadd.f32 0.0, %v722
  %v724 = vpop.f32.mrf.mxu0
  %725 = vdwg.mxu0
  %v726 = vpack.c.bf16 %v720, %v718
  %v727 = vpack.c.bf16 %v723, %v723
  %v730 = vunpack.c.l.b16 %v352
  %v731 = vunpack.c.l.b16 %v353
  %v732 = vpack.c.b16 %v731, %v730
  %v735 = vsel %vm157, %v726, 0
  %v738 = vsel %vm157, %v727, 0
  %740 = vmatpush.bf16.msra.mxu0 0
  %741 = vmatpush.bf16.msra.mxu0 0
  %742 = vmatpush.bf16.msra.mxu0 0
  %743 = vmatpush.bf16.msra.mxu0 0
  %744 = vmatpush.bf16.msra.mxu0 0
  %745 = vmatpush.bf16.msra.mxu0 0
  %746 = vmatpush.bf16.msra.mxu0 0
  %747 = vmatpush.bf16.msra.mxu0 %v732
  %748 = vmatmul.bf16.gmra.mxu0 %v735
  %v749 = vpop.f32.mrf.mxu0
  %v750 = vadd.f32 0.0, %v749
  %v751 = vpop.f32.mrf.mxu0
  %v752 = vadd.f32 0.0, %v751
  %753 = vmatmul.bf16.gmra.mxu0 %v738
  %v754 = vpop.f32.mrf.mxu0
  %v755 = vadd.f32 0.0, %v754
  %v756 = vpop.f32.mrf.mxu0
  %757 = vdwg.mxu0
  %v758 = vadd.f32 %v691, %v750
  %v759 = vadd.f32 %v692, %v752
  %v760 = vadd.f32 %v693, %v755
  %v764 = vunpack.c.l.b16 %v333
  %v765 = vunpack.c.l.b16 %v334
  %v766 = vunpack.c.l.b16 %v335
  %v767 = vpack.c.b16 %v765, %v764
  %v768 = vpack.c.b16 %v766, %v766
  %v770 = vsel %vm368, %v767, 0
  %v773 = vsel %vm368, %v768, 0
  %775 = vmatpush.bf16.msra.mxu0 0
  %776 = vmatpush.bf16.msra.mxu0 %v377
  %777 = vmatpush.bf16.msra.mxu0 %v313
  %778 = vmatpush.bf16.msra.mxu0 %v312
  %779 = vmatpush.bf16.msra.mxu0 %v311
  %780 = vmatpush.bf16.msra.mxu0 %v310
  %781 = vmatpush.bf16.msra.mxu0 %v309
  %782 = vmatpush.bf16.msra.mxu0 %v308
  %783 = vmatmul.bf16.gmra.mxu0 %v770
  %v784 = vpop.f32.mrf.mxu0
  %v785 = vadd.f32 0.0, %v784
  %v786 = vpop.f32.mrf.mxu0
  %v787 = vadd.f32 0.0, %v786
  %788 = vmatmul.bf16.gmra.mxu0 %v773
  %v789 = vpop.f32.mrf.mxu0
  %v790 = vadd.f32 0.0, %v789
  %v791 = vpop.f32.mrf.mxu0
  %792 = vdwg.mxu0
  %v793 = vpack.c.bf16 %v787, %v785
  %v794 = vpack.c.bf16 %v790, %v790
  %v797 = vunpack.c.l.b16 %v354
  %v798 = vunpack.c.l.b16 %v355
  %v799 = vpack.c.b16 %v798, %v797
  %v802 = vsel %vm157, %v793, 0
  %v805 = vsel %vm157, %v794, 0
  %807 = vmatpush.bf16.msra.mxu0 0
  %808 = vmatpush.bf16.msra.mxu0 0
  %809 = vmatpush.bf16.msra.mxu0 0
  %810 = vmatpush.bf16.msra.mxu0 0
  %811 = vmatpush.bf16.msra.mxu0 0
  %812 = vmatpush.bf16.msra.mxu0 0
  %813 = vmatpush.bf16.msra.mxu0 0
  %814 = vmatpush.bf16.msra.mxu0 %v799
  %815 = vmatmul.bf16.gmra.mxu0 %v802
  %v816 = vpop.f32.mrf.mxu0
  %v817 = vadd.f32 0.0, %v816
  %v818 = vpop.f32.mrf.mxu0
  %v819 = vadd.f32 0.0, %v818
  %820 = vmatmul.bf16.gmra.mxu0 %v805
  %v821 = vpop.f32.mrf.mxu0
  %v822 = vadd.f32 0.0, %v821
  %v823 = vpop.f32.mrf.mxu0
  %824 = vdwg.mxu0
  %v825 = vadd.f32 %v758, %v817
  %v826 = vadd.f32 %v759, %v819
  %v827 = vadd.f32 %v760, %v822
  %v831 = vunpack.c.l.b16 %v336
  %v832 = vunpack.c.l.b16 %v337
  %v833 = vunpack.c.l.b16 %v338
  %v834 = vpack.c.b16 %v832, %v831
  %v835 = vpack.c.b16 %v833, %v833
  %v837 = vsel %vm368, %v834, 0
  %v840 = vsel %vm368, %v835, 0
  %842 = vmatpush.bf16.msra.mxu0 0
  %843 = vmatpush.bf16.msra.mxu0 %v377
  %844 = vmatpush.bf16.msra.mxu0 %v313
  %845 = vmatpush.bf16.msra.mxu0 %v312
  %846 = vmatpush.bf16.msra.mxu0 %v311
  %847 = vmatpush.bf16.msra.mxu0 %v310
  %848 = vmatpush.bf16.msra.mxu0 %v309
  %849 = vmatpush.bf16.msra.mxu0 %v308
  %850 = vmatmul.bf16.gmra.mxu0 %v837
  %v851 = vpop.f32.mrf.mxu0
  %v852 = vadd.f32 0.0, %v851
  %v853 = vpop.f32.mrf.mxu0
  %v854 = vadd.f32 0.0, %v853
  %855 = vmatmul.bf16.gmra.mxu0 %v840
  %v856 = vpop.f32.mrf.mxu0
  %v857 = vadd.f32 0.0, %v856
  %v858 = vpop.f32.mrf.mxu0
  %859 = vdwg.mxu0
  %v860 = vpack.c.bf16 %v854, %v852
  %v861 = vpack.c.bf16 %v857, %v857
  %v864 = vunpack.c.l.b16 %v356
  %v865 = vunpack.c.l.b16 %v357
  %v866 = vpack.c.b16 %v865, %v864
  %v869 = vsel %vm157, %v860, 0
  %v872 = vsel %vm157, %v861, 0
  %874 = vmatpush.bf16.msra.mxu0 0
  %875 = vmatpush.bf16.msra.mxu0 0
  %876 = vmatpush.bf16.msra.mxu0 0
  %877 = vmatpush.bf16.msra.mxu0 0
  %878 = vmatpush.bf16.msra.mxu0 0
  %879 = vmatpush.bf16.msra.mxu0 0
  %880 = vmatpush.bf16.msra.mxu0 0
  %881 = vmatpush.bf16.msra.mxu0 %v866
  %882 = vmatmul.bf16.gmra.mxu0 %v869
  %v883 = vpop.f32.mrf.mxu0
  %v884 = vadd.f32 0.0, %v883
  %v885 = vpop.f32.mrf.mxu0
  %v886 = vadd.f32 0.0, %v885
  %887 = vmatmul.bf16.gmra.mxu0 %v872
  %v888 = vpop.f32.mrf.mxu0
  %v889 = vadd.f32 0.0, %v888
  %v890 = vpop.f32.mrf.mxu0
  %891 = vdwg.mxu0
  %v892 = vadd.f32 %v825, %v884
  %v893 = vadd.f32 %v826, %v886
  %v894 = vadd.f32 %v827, %v889
  %v898 = vunpack.c.l.b16 %v339
  %v899 = vunpack.c.l.b16 %v340
  %v900 = vunpack.c.l.b16 %v341
  %v901 = vpack.c.b16 %v899, %v898
  %v902 = vpack.c.b16 %v900, %v900
  %v904 = vsel %vm368, %v901, 0
  %v907 = vsel %vm368, %v902, 0
  %909 = vmatpush.bf16.msra.mxu0 0
  %910 = vmatpush.bf16.msra.mxu0 %v377
  %911 = vmatpush.bf16.msra.mxu0 %v313
  %912 = vmatpush.bf16.msra.mxu0 %v312
  %913 = vmatpush.bf16.msra.mxu0 %v311
  %914 = vmatpush.bf16.msra.mxu0 %v310
  %915 = vmatpush.bf16.msra.mxu0 %v309
  %916 = vmatpush.bf16.msra.mxu0 %v308
  %917 = vmatmul.bf16.gmra.mxu0 %v904
  %v918 = vpop.f32.mrf.mxu0
  %v919 = vadd.f32 0.0, %v918
  %v920 = vpop.f32.mrf.mxu0
  %v921 = vadd.f32 0.0, %v920
  %922 = vmatmul.bf16.gmra.mxu0 %v907
  %v923 = vpop.f32.mrf.mxu0
  %v924 = vadd.f32 0.0, %v923
  %v925 = vpop.f32.mrf.mxu0
  %926 = vdwg.mxu0
  %v927 = vpack.c.bf16 %v921, %v919
  %v928 = vpack.c.bf16 %v924, %v924
  %v931 = vunpack.c.l.b16 %v358
  %v932 = vunpack.c.l.b16 %v359
  %v933 = vpack.c.b16 %v932, %v931
  %v936 = vsel %vm157, %v927, 0
  %v939 = vsel %vm157, %v928, 0
  %941 = vmatpush.bf16.msra.mxu0 0
  %942 = vmatpush.bf16.msra.mxu0 0
  %943 = vmatpush.bf16.msra.mxu0 0
  %944 = vmatpush.bf16.msra.mxu0 0
  %945 = vmatpush.bf16.msra.mxu0 0
  %946 = vmatpush.bf16.msra.mxu0 0
  %947 = vmatpush.bf16.msra.mxu0 0
  %948 = vmatpush.bf16.msra.mxu0 %v933
  %949 = vmatmul.bf16.gmra.mxu0 %v936
  %v950 = vpop.f32.mrf.mxu0
  %v951 = vadd.f32 0.0, %v950
  %v952 = vpop.f32.mrf.mxu0
  %v953 = vadd.f32 0.0, %v952
  %954 = vmatmul.bf16.gmra.mxu0 %v939
  %v955 = vpop.f32.mrf.mxu0
  %v956 = vadd.f32 0.0, %v955
  %v957 = vpop.f32.mrf.mxu0
  %958 = vdwg.mxu0
  %v959 = vadd.f32 %v892, %v951
  %v960 = vadd.f32 %v893, %v953
  %v961 = vadd.f32 %v894, %v956
  %v962 = vld [vmem:[%s6] sm:$0x1]
  %v963 = vld [vmem:[%s7] sm:$0x1]
  %vm964 = vcmask 261120
  %v965 = vsel %vm964, %v959, 0.0
  %v966 = vsel %vm964, %v960, 0.0
  %v967 = vadd.f32 %v965, %v966
  %vm968 = vcmask 254976
  %v969 = vsel %vm968, %v961, 0.0
  %v970 = vadd.f32 %v967, %v969
  %v971 = vrot.slane %v970, 4
  %v972 = vadd.f32 %v970, %v971
  %v973 = vrot.slane %v972, 2
  %v974 = vadd.f32 %v972, %v973
  %v975 = vrot.slane %v974, 1
  %v976 = vadd.f32 %v974, %v975
  %v977 = vmul.f32 %v976, 0.055555556
  %v978 = vsub.f32 %v959, %v977
  %v979 = vsub.f32 %v960, %v977
  %v980 = vsub.f32 %v961, %v977
  %v981 = vmul.f32 %v978, %v978
  %v982 = vmul.f32 %v979, %v979
  %v983 = vmul.f32 %v980, %v980
  %v984 = vsel %vm964, %v981, 0.0
  %v985 = vsel %vm964, %v982, 0.0
  %v986 = vadd.f32 %v984, %v985
  %v987 = vsel %vm968, %v983, 0.0
  %v988 = vadd.f32 %v986, %v987
  %v989 = vrot.slane %v988, 4
  %v990 = vadd.f32 %v988, %v989
  %v991 = vrot.slane %v990, 2
  %v992 = vadd.f32 %v990, %v991
  %v993 = vrot.slane %v992, 1
  %v994 = vadd.f32 %v992, %v993
  %v995 = vmul.f32 %v994, 0.055555556
  %v996 = vadd.f32 %v995, 1e-05
  %v997 = vrsqrt.pop %v996
  %v998 = vmul.f32 %v997, %v996
  %v999 = vmul.f32 %v998, %v997
  %v1000 = vmul.f32 0.5, %v999
  %v1001 = vsub.f32 1.5, %v1000
  %v1002 = vmul.f32 %v997, %v1001
  %vm1003 = vweird.f32 %v996
  %vm1004 = vweird.f32 %v997
  %vm1005 = vmor %vm1003, %vm1004
  %v1006 = vsel %vm1005, %v997, %v1002
  %v1007 = vmul.f32 %v962, %v1006
  %v1008 = vmul.f32 %v977, %v1007
  %v1009 = vsub.f32 %v963, %v1008
  %v1011 = vperm.slane %v1007, 0
  %v1013 = vmul.f32 %v959, %v1011
  %v1014 = vmul.f32 %v960, %v1011
  %v1015 = vmul.f32 %v961, %v1011
  %v1017 = vperm.slane %v1009, 0
  %v1019 = vadd.f32 %v1013, %v1017
  %v1020 = vadd.f32 %v1014, %v1017
  %v1021 = vadd.f32 %v1015, %v1017
  %v1022 = vmax.f32 %v1019, 0.0
  %v1023 = vmax.f32 %v1020, 0.0
  %v1024 = vmax.f32 %v1021, 0.0
  %1025 = vst.msk [vmem:[%s8] sm:$0xff] %vm964, %v1022
  %vm1026 = vcmask 253952
  %1027 = vst.msk [vmem:[%s8 + $0x8] sm:$0x1] %vm1026, %v1023
  %s1028 = scalar_lea.vmem %s8, 16
  %vm1029 = vcmask 261121
  %1030 = vst.msk [vmem:[%s1028 - $0x1] sm:$0xfe] %vm1029, %v1023
  %1031 = vst.msk [vmem:[%s1028 + $0x7] sm:$0x3] %vm968, %v1024
  // Predicated region
  $region34: #{cnn_forward_fn.1} parent=0 // pred_check
    _
  $region35: #{cnn_forward_fn.1} parent=0 // pred_check_branch
    %1033 = sbr.rel (0) target = $region37
  $region36: #{cnn_forward_fn.1} parent=0 // pred_region
    _
  $region37: #{cnn_forward_fn.1} parent=0 // pred_fallthru
    _
  // Predicated region
  $region38: #{cnn_forward_fn.1} parent=0 // pred_check
    _
  $region39: #{cnn_forward_fn.1} parent=0 // pred_check_branch
    %1035 = sbr.rel (0) target = $region41
  $region40: #{cnn_forward_fn.1} parent=0 // pred_region
    _
  $region41: #{cnn_forward_fn.1} parent=0 // pred_fallthru
    _

</llo_original>
